<compile_context>
chip_gen: v7x
topology: tpu7x:2x2x1
jax: 0.10.0
libtpu: 0.0.40
codegen_flags: <defaults>
</compile_context>

<pallas_src>
import numpy as np
import jax
import jax.numpy as jnp
from jax.experimental import pallas as pl
from jax.experimental.pallas import tpu as pltpu

KH = KW = 3                      # conv kernel size
DIL = 2                          # dilation
H_IN = W_IN = 7                  # spatial input -> conv output 3x3
H_OUT = H_IN - (KH - 1) * DIL    # 3
W_OUT = W_IN - (KW - 1) * DIL    # 3  (== Linear in_features)
K_RAW = H_IN * W_IN              # 49 flattened input pixels (full last dim)

_MIN_TILE = 8                    # sublane-aligned minimum batch tile
_MAX_TILE = 1024                 # big tiles amortize per-step overhead; still
                                 # only ~0.4 MiB double-buffered at K=49 (f32)

# Static (trace-time) scatter pattern mapping (i, j, p, q) -> flat input pixel.
_i = np.arange(H_OUT)[:, None, None, None]          # conv output row == Linear out idx
_j = np.arange(W_OUT)[None, :, None, None]          # conv output col == Linear in feature
_p = np.arange(KH)[None, None, :, None]
_q = np.arange(KW)[None, None, None, :]
_FLAT_IDX = np.broadcast_to((_i + _p * DIL) * W_IN + (_j + _q * DIL),
                            (H_OUT, W_OUT, KH, KW)).reshape(-1)
_COL_IDX = np.broadcast_to(_i, (H_OUT, W_OUT, KH, KW)).reshape(-1)


def _affine_kernel(x_ref, w_ref, b_ref, o_ref):
    """conv -> permute -> linear collapsed into one dot (+ bias on the VPU).

    x_ref: (B_TILE, 49) f32   flattened input rows (natural width, no padding)
    w_ref: (49, 3)      f32   folded conv*linear weights (resident in VMEM)
    b_ref: (1, 3)       f32   fused bias (resident in VMEM)
    o_ref: (B_TILE, 3)  f32   output block
    """
    o_ref[...] = (jnp.dot(x_ref[...], w_ref[...],
                          preferred_element_type=jnp.float32)
                  + b_ref[...])


def _build_effective_weights(wconv, bconv, wlin, blin):
    """Fold Conv2d(1,1,3,stride=1,pad=0,dil=2) + Linear(3,1) into (W_eff, b_eff).

    y[b, i] = sum_{p,q,j} x[b, i + p*DIL, j + q*DIL] * wconv[p,q] * wlin[0,j]
              + (bconv * sum_j wlin[0,j] + blin)
    Built with jnp ops (static scatter indices) so it works under jit with
    traced weights.
    """
    wconv = jnp.asarray(wconv, jnp.float32).reshape(KH, KW)
    bconv = jnp.asarray(bconv, jnp.float32).reshape(())
    wlin = jnp.asarray(wlin, jnp.float32).reshape(1, W_OUT)
    blin = jnp.asarray(blin, jnp.float32).reshape(())

    # vals[i, j, p, q] = wconv[p, q] * wlin[0, j]   (independent of i)
    vals = wlin[0][None, :, None, None] * wconv[None, None, :, :]
    vals = jnp.broadcast_to(vals, (H_OUT, W_OUT, KH, KW)).reshape(-1)
    w_eff = jnp.zeros((K_RAW, H_OUT), jnp.float32).at[_FLAT_IDX, _COL_IDX].add(vals)

    b_eff = (bconv * wlin[0].sum() + blin).reshape(1, 1)
    b_eff = jnp.broadcast_to(b_eff, (1, H_OUT))
    return w_eff, b_eff


def _pick_b_tile(b):
    """Large tiles to amortize the ~0.35us/step overhead, but keep >= 2 grid
    steps (when possible) so v7x megacore can shard the parallel batch axis."""
    if b <= 2 * _MIN_TILE:
        return _MIN_TILE
    half = -(-b // 2)                               # ceil(b / 2)
    half = ((half + _MIN_TILE - 1) // _MIN_TILE) * _MIN_TILE
    return min(_MAX_TILE, half)


def model_forward(x_nchw, wconv, bconv, wlin, blin):
    """x_nchw: (B, 1, H_IN, W_IN) -> (B, 1, H_OUT, 1), matching the torch module."""
    B, C, H, W = x_nchw.shape
    assert C == 1 and H == H_IN and W == W_IN, (x_nchw.shape,)

    w_eff, b_eff = _build_effective_weights(wconv, bconv, wlin, blin)

    b_tile = _pick_b_tile(B)
    b_pad = pl.cdiv(B, b_tile) * b_tile

    # Plain reshape only; no padded / bias-augmented copy of x in HBM.
    x2d = x_nchw.reshape(B, K_RAW).astype(jnp.float32)
    if b_pad != B:
        x2d = jnp.pad(x2d, ((0, b_pad - B), (0, 0)))

    out2d = pl.pallas_call(
        _affine_kernel,
        out_shape=jax.ShapeDtypeStruct((b_pad, H_OUT), jnp.float32),
        grid=(b_pad // b_tile,),
        in_specs=[
            # Batch tile; last dim 49 == full array dim (block-shape rule ok).
            pl.BlockSpec((b_tile, K_RAW), lambda i: (i, 0)),
            # Weights and bias: constant index_map -> resident, not re-DMA'd.
            pl.BlockSpec((K_RAW, H_OUT), lambda i: (0, 0)),
            pl.BlockSpec((1, H_OUT), lambda i: (0, 0)),
        ],
        out_specs=pl.BlockSpec((b_tile, H_OUT), lambda i: (i, 0)),
        compiler_params=pltpu.CompilerParams(
            dimension_semantics=("parallel",)),
    )(x2d, w_eff, b_eff)

    return out2d[:B].reshape(B, 1, H_OUT, 1)


def _reference(x_nchw, wconv, bconv, wlin, blin):
    """Plain-JAX reference (explicit dilated conv + linear)."""
    B = x_nchw.shape[0]
    x3 = x_nchw.reshape(B, H_IN, W_IN).astype(jnp.float32)
    acc = jnp.zeros((B, H_OUT, W_OUT), jnp.float32)
    for p in range(KH):
        for q in range(KW):
            acc = acc + x3[:, p * DIL: p * DIL + H_OUT,
                           q * DIL: q * DIL + W_OUT] * wconv[p, q]
    acc = acc + bconv[0]
    y = acc @ wlin[0] + blin[0]
    return y.reshape(B, 1, H_OUT, 1)


if __name__ == "__main__":
    key = jax.random.PRNGKey(0)
    k_x, k_wc, k_bc, k_wl, k_bl = jax.random.split(key, 5)

    B = 16   # two grid steps at B_TILE=8 -> exercises the pipelined/parallel batch grid
    x = jax.random.normal(k_x, (B, 1, H_IN, W_IN), dtype=jnp.float32)

    # Deterministic synthetic parameters (shapes match the torch module).
    wconv = jax.random.normal(k_wc, (KH, KW), dtype=jnp.float32) * 0.3   # Conv2d weight (1,1,3,3) squeezed
    bconv = jax.random.normal(k_bc, (1,), dtype=jnp.float32) * 0.1       # Conv2d bias  (1,)
    wlin = jax.random.normal(k_wl, (1, W_OUT), dtype=jnp.float32) * 0.3  # Linear weight (1,3)
    blin = jax.random.normal(k_bl, (1,), dtype=jnp.float32) * 0.1        # Linear bias   (1,)

    fwd = jax.jit(model_forward)
    out = jax.block_until_ready(fwd(x, wconv, bconv, wlin, blin))

    ref = _reference(x, wconv, bconv, wlin, blin)
    assert out.shape == (B, 1, H_OUT, 1), out.shape
    assert jnp.allclose(out, ref, atol=1e-5, rtol=1e-5), (out, ref)

    print("KERNEL_OK")
</pallas_src>

<mosaic_0001>
module attributes {stable_mosaic.version = 11 : i64} {
  func.func @_affine_kernel(%arg0: i32, %arg1: memref<8x49xf32, #tpu.memory_space<vmem>>, %arg2: memref<49x3xf32, #tpu.memory_space<vmem>>, %arg3: memref<1x3xf32, #tpu.memory_space<vmem>>, %arg4: memref<8x3xf32, #tpu.memory_space<vmem>>) attributes {dimension_semantics = [#tpu.dimension_semantics<parallel>], iteration_bounds = array<i64: 2>, scalar_prefetch = 0 : i64, scratch_operands = 0 : i64, tpu.core_type = #tpu.core_type<tc>, window_params = [{transform_indices = @transform_0, window_bounds = array<i64: 8, 49>}, {pipeline_mode = #tpu.pipeline_mode<synchronous>, transform_indices = @transform_1, window_bounds = array<i64: 49, 3>}, {pipeline_mode = #tpu.pipeline_mode<synchronous>, transform_indices = @transform_2, window_bounds = array<i64: 1, 3>}, {transform_indices = @transform_3, window_bounds = array<i64: 8, 3>}]} {
    %c0 = arith.constant 0 : index
    %c0_0 = arith.constant 0 : index
    %0 = vector.load %arg1[%c0, %c0_0] : memref<8x49xf32, #tpu.memory_space<vmem>>, vector<8x49xf32>
    %c0_1 = arith.constant 0 : index
    %c0_2 = arith.constant 0 : index
    %1 = vector.load %arg2[%c0_1, %c0_2] : memref<49x3xf32, #tpu.memory_space<vmem>>, vector<49x3xf32>
    %cst = arith.constant dense<0.000000e+00> : vector<8x3xf32>
    %2 = tpu.matmul %0, %1, %cst {dimension_numbers = #tpu.dot_dimension_numbers<[1], [0], [0], [1], [0, 0, 1, 1], [], []>} : vector<8x49xf32>, vector<49x3xf32>, vector<8x3xf32> -> vector<8x3xf32>
    %c0_3 = arith.constant 0 : index
    %c0_4 = arith.constant 0 : index
    %3 = vector.load %arg3[%c0_3, %c0_4] : memref<1x3xf32, #tpu.memory_space<vmem>>, vector<1x3xf32>
    %4 = vector.broadcast %3 : vector<1x3xf32> to vector<8x3xf32>
    %5 = arith.addf %2, %4 : vector<8x3xf32>
    %c0_5 = arith.constant 0 : index
    %c0_6 = arith.constant 0 : index
    %6 = vector.load %arg4[%c0_5, %c0_6] : memref<8x3xf32, #tpu.memory_space<vmem>>, vector<8x3xf32>
    tpu.vector_store %arg4[%c0_5, %c0_6], %5 {strides = array<i32>} : memref<8x3xf32, #tpu.memory_space<vmem>>, vector<8x3xf32>,
    return
  }
  func.func @transform_0(%arg0: i32) -> (i32, i32) {
    %c0_i32 = arith.constant 0 : i32
    %c0_i32_0 = arith.constant 0 : i32
    return %arg0, %c0_i32 : i32, i32
  }
  func.func @transform_1(%arg0: i32) -> (i32, i32) {
    %c0_i32 = arith.constant 0 : i32
    %c0_i32_0 = arith.constant 0 : i32
    %c0_i32_1 = arith.constant 0 : i32
    return %c0_i32, %c0_i32_0 : i32, i32
  }
  func.func @transform_2(%arg0: i32) -> (i32, i32) {
    %c0_i32 = arith.constant 0 : i32
    %c0_i32_0 = arith.constant 0 : i32
    %c0_i32_1 = arith.constant 0 : i32
    return %c0_i32, %c0_i32_0 : i32, i32
  }
  func.func @transform_3(%arg0: i32) -> (i32, i32) {
    %c0_i32 = arith.constant 0 : i32
    %c0_i32_0 = arith.constant 0 : i32
    return %arg0, %c0_i32 : i32, i32
  }
}

</mosaic_0001>

<llo_original>
// kernel: model_forward.1
$region0: #{model_forward.1}
  #allocation0 [shape = 'u32[]', space=smem, size = 0x4, offset = 0x4, fixed_abs, tag = 'smem constant byte address 0x4 - core index']
  #allocation1 [shape = 'u32[144,128]{1,0:T(1,128)}', space=vmem, size = 0x12000, scoped, tag = 'internal scratch']
  %s0 = inlined_call_operand.vmem [shape: f32[16,49], index: 0, kind: input, shape index: {}]
  %s1 = inlined_call_operand.vmem [shape: f32[49,3], index: 1, kind: input, shape index: {}]
  %s2 = inlined_call_operand.vmem [shape: f32[1,3], index: 2, kind: input, shape index: {}]
  %s3 = inlined_call_operand.vmem [shape: f32[16,3], index: 3, kind: output, shape index: {}]
  %s4 = sld [smem:[#allocation0]]
  $region45: #{model_forward.1} parent=0
    _
  %s6 = ssub.s32 1, %s4
  %s7 = scalar_select 0, %s6, %s4
  loop: start=0, step=1, limit=4
  $region2: #{model_forward.1} parent=0 // loop_pre_header
    _
  $region3: #{model_forward.1} parent=0 // loop_header
    %s9 = sphi 0, %s13
    %p10 = scmp.ge.s32.totalorder %s9, 4
    %s19 = sphi 0, %s21
    %s22 = sphi 0, %s19
    %s23 = sphi 0, %s22
    %s39 = sphi 0, %s23
    %s43 = sphi 0, %s43
    %s45 = sphi 0, %s43
    %s46 = sphi 0, %s45
    %s60 = sphi 0, %s46
    %s64 = sphi 0, %s64
    %s66 = sphi 0, %s64
    %s67 = sphi 0, %s66
    %s81 = sphi 0, %s67
    %s87 = sphi 0, %s89
    %s90 = sphi 0, %s87
    %s91 = sphi 0, %s90
    %s107 = sphi 0, %s91
  $region4: #{model_forward.1} parent=0 // loop_header_branch
    %12 = sbr.rel (%p10) target = $region8
  $region5: #{model_forward.1} parent=0 // loop_body
    %s14 = ssub.s32 %s9, 1
    %s15 = ssub.s32 %s9, 2
    %s16 = sadd.s32 %s9, 1
    %s17 = ssub.s32 %s9, %s16
    %p18 = scmp.eq.s32.totalorder %s17, 0
    %s20 = sadd.s32 %s19, 1
    %s21 = scalar_select %p18, %s19, %s20
    %p24 = pneg %p18
    %p25 = scmp.eq.s32.totalorder %s9, 1
    %p26 = por %p24, %p25
    %p27 = scmp.ne.s32.totalorder %s19, %s22
    %p28 = scmp.eq.s32.totalorder %s9, 0
    %p29 = por %p27, %p28
    %p30 = scmp.ne.s32.totalorder %s19, %s22
    %p31 = scmp.eq.s32.totalorder %s14, 1
    %p32 = por %p30, %p31
    %p33 = scmp.ne.s32.totalorder %s22, %s23
    %p34 = scmp.eq.s32.totalorder %s14, 0
    %p35 = por %p33, %p34
    %p36 = scmp.ne.s32.totalorder %s22, %s23
    %p37 = scmp.eq.s32.totalorder %s15, 1
    %p38 = por %p36, %p37
    %p40 = scmp.ne.s32.totalorder %s23, %s39
    %p41 = scmp.eq.s32.totalorder %s15, 0
    %p42 = por %p40, %p41
    %s44 = sadd.s32 %s43, 1
    %p47 = scmp.eq.s32.totalorder %s9, 1
    %p48 = scmp.ne.s32.totalorder %s43, %s45
    %p49 = scmp.eq.s32.totalorder %s9, 0
    %p50 = por %p48, %p49
    %p51 = scmp.ne.s32.totalorder %s43, %s45
    %p52 = scmp.eq.s32.totalorder %s14, 1
    %p53 = por %p51, %p52
    %p54 = scmp.ne.s32.totalorder %s45, %s46
    %p55 = scmp.eq.s32.totalorder %s14, 0
    %p56 = por %p54, %p55
    %p57 = scmp.ne.s32.totalorder %s45, %s46
    %p58 = scmp.eq.s32.totalorder %s15, 1
    %p59 = por %p57, %p58
    %p61 = scmp.ne.s32.totalorder %s46, %s60
    %p62 = scmp.eq.s32.totalorder %s15, 0
    %p63 = por %p61, %p62
    %s65 = sadd.s32 %s64, 1
    %p68 = scmp.eq.s32.totalorder %s9, 1
    %p69 = scmp.ne.s32.totalorder %s64, %s66
    %p70 = scmp.eq.s32.totalorder %s9, 0
    %p71 = por %p69, %p70
    %p72 = scmp.ne.s32.totalorder %s64, %s66
    %p73 = scmp.eq.s32.totalorder %s14, 1
    %p74 = por %p72, %p73
    %p75 = scmp.ne.s32.totalorder %s66, %s67
    %p76 = scmp.eq.s32.totalorder %s14, 0
    %p77 = por %p75, %p76
    %p78 = scmp.ne.s32.totalorder %s66, %s67
    %p79 = scmp.eq.s32.totalorder %s15, 1
    %p80 = por %p78, %p79
    %p82 = scmp.ne.s32.totalorder %s67, %s81
    %p83 = scmp.eq.s32.totalorder %s15, 0
    %p84 = por %p82, %p83
    %s85 = ssub.s32 %s9, %s16
    %p86 = scmp.eq.s32.totalorder %s85, 0
    %s88 = sadd.s32 %s87, 1
    %s89 = scalar_select %p86, %s87, %s88
    %p92 = pneg %p86
    %p93 = scmp.eq.s32.totalorder %s9, 1
    %p94 = por %p92, %p93
    %p95 = scmp.ne.s32.totalorder %s87, %s90
    %p96 = scmp.eq.s32.totalorder %s9, 0
    %p97 = por %p95, %p96
    %p98 = scmp.ne.s32.totalorder %s87, %s90
    %p99 = scmp.eq.s32.totalorder %s14, 1
    %p100 = por %p98, %p99
    %p101 = scmp.ne.s32.totalorder %s90, %s91
    %p102 = scmp.eq.s32.totalorder %s14, 0
    %p103 = por %p101, %p102
    %p104 = scmp.ne.s32.totalorder %s90, %s91
    %p105 = scmp.eq.s32.totalorder %s15, 1
    %p106 = por %p104, %p105
    %p108 = scmp.ne.s32.totalorder %s91, %s107
    %p109 = scmp.eq.s32.totalorder %s15, 0
    %p110 = por %p108, %p109
    %p111 = scmp.le.s32.totalorder 1, %s9
    %p112 = scmp.lt.s32.totalorder %s9, 3
    %p113 = pnand %p111, %p112
    %p114 = pneg %p113
    // Predicated region
    $region9: #{model_forward.1} parent=5 // pred_check
      _
    $region10: #{model_forward.1} parent=5 // pred_check_branch
      %116 = sbr.rel (%p113) target = $region12
    $region11: #{model_forward.1} parent=5 // pred_region
      %s117 = ssub.s32 %s9, 1
      // Predicated region
      $region13: #{model_forward.1} parent=11 // pred_check
        %p118 = pneg %p56
      $region14: #{model_forward.1} parent=11 // pred_check_branch
        %120 = sbr.rel (%p118) target = $region16
      $region15: #{model_forward.1} parent=11 // pred_region
        _
      $region16: #{model_forward.1} parent=11 // pred_fallthru
        _
      // Predicated region
      $region17: #{model_forward.1} parent=11 // pred_check
        %p121 = pneg %p77
      $region18: #{model_forward.1} parent=11 // pred_check_branch
        %123 = sbr.rel (%p121) target = $region20
      $region19: #{model_forward.1} parent=11 // pred_region
        _
      $region20: #{model_forward.1} parent=11 // pred_fallthru
        _
    $region12: #{model_forward.1} parent=5 // pred_fallthru
      _
    %p124 = scmp.lt.s32.totalorder %s9, 2
    // Predicated region
    $region21: #{model_forward.1} parent=5 // pred_check
      %p125 = pneg %p124
    $region22: #{model_forward.1} parent=5 // pred_check_branch
      %127 = sbr.rel (%p125) target = $region24
    $region23: #{model_forward.1} parent=5 // pred_region
      // Predicated region
      $region25: #{model_forward.1} parent=23 // pred_check
        %p128 = pneg %p29
      $region26: #{model_forward.1} parent=23 // pred_check_branch
        %130 = sbr.rel (%p128) target = $region28
      $region27: #{model_forward.1} parent=23 // pred_region
        %p131 = scmp.lt.s32.totalorder %s9, 1
        %s132 = scalar_select %p131, %s9, 1
        %s133 = smul.addr %s132, 8
        %s134 = scalar_lea.vmem %s0, %s133
      $region28: #{model_forward.1} parent=23 // pred_fallthru
        _
    $region24: #{model_forward.1} parent=5 // pred_fallthru
      _
    %p135 = scmp.le.s32.totalorder 1, %s9
    %p136 = scmp.lt.s32.totalorder %s9, 3
    %p137 = pnand %p135, %p136
    %p138 = pneg %p137
    // Predicated region
    $region29: #{model_forward.1} parent=5 // pred_check
      _
    $region30: #{model_forward.1} parent=5 // pred_check_branch
      %140 = sbr.rel (%p137) target = $region32
    $region31: #{model_forward.1} parent=5 // pred_region
      %s141 = ssub.s32 %s9, 1
      %p142 = scmp.lt.s32.totalorder %s14, 1
      %s143 = scalar_select %p142, %s14, 1
      %s144 = smul.addr %s143, 8
      %s145 = scalar_lea.vmem %s0, %s144
      %p146 = pneg %p35
      %p147 = pneg %p32
      %p148 = pneg %p56
      %p149 = pneg %p53
      %p150 = pneg %p77
      %p151 = pneg %p74
      %p152 = pneg %p103
      %p153 = pneg %p100
      %p154 = scmp.lt.s32.totalorder %s14, 1
      %s155 = scalar_select %p154, %s14, 1
      %s156 = smul.addr %s155, 8
      %s157 = scalar_lea.vmem %s3, %s156
      %p158 = scmp.lt.s32.totalorder %s14, 1
      %s159 = scalar_select %p158, %s14, 1
      %s160 = smul.addr %s159, 8
      %s161 = scalar_lea.vmem %s0, %s160
      %p162 = scmp.lt.s32.totalorder %s14, 1
      %s163 = scalar_select %p162, %s14, 1
      %s164 = smul.addr %s163, 8
      %s165 = scalar_lea.vmem %s3, %s164
      %v166 = vld [vmem:[%s161] sm:$0xff]
      %v167 = vld [vmem:[%s1] sm:$0xff]
      %v168 = vld [vmem:[%s1 + $0x8] sm:$0xff]
      %v169 = vld [vmem:[%s1 + $0x10] sm:$0xff]
      %v170 = vld [vmem:[%s1 + $0x18] sm:$0xff]
      %v171 = vld [vmem:[%s1 + $0x20] sm:$0xff]
      %v172 = vld [vmem:[%s1 + $0x28] sm:$0xff]
      %v173 = vld [vmem:[%s1 + $0x30] sm:$0x1]
      %v174 = vld [vmem:[%s2] sm:$0x1]
      %v176 = vlaneseq
      %v177 = vshrl.u32 %v176, 7
      %v178 = vsub.s32 0, %v177
      %v179 = vrot.slane %v174, %v178
      %vm181 = vcmask 400384
      %v183 = vsel %vm181, %v166, 0
      %vm185 = vcmask 1040384
      %v187 = vsel %vm185, %v173, 0
      %189 = vmatprep.subr.mxu0 0.0
      %190 = vmatpush1.msra.mxu0 %v167
      %191 = vmatprep.subr.mxu0 0.0
      %192 = vmatpush1.msra.mxu0 %v168
      %193 = vmatprep.subr.mxu0 0.0
      %194 = vmatpush1.msra.mxu0 %v169
      %195 = vmatprep.subr.mxu0 0.0
      %196 = vmatpush1.msra.mxu0 %v170
      %197 = vmatprep.subr.mxu0 0.0
      %198 = vmatpush1.msra.mxu0 %v171
      %199 = vmatprep.subr.mxu0 0.0
      %200 = vmatpush1.msra.mxu0 %v172
      %201 = vmatprep.subr.mxu0 0.0
      %202 = vmatpush1.msra.mxu0 %v187
      %203 = vmatprep.subr.mxu0 0.0
      %204 = vmatpush1.msra.mxu0 0.0
      %205 = vmatprep.subr.mxu0 0.0
      %206 = vmatpush1.msra.mxu0 0.0
      %207 = vmatprep.subr.mxu0 0.0
      %208 = vmatpush1.msra.mxu0 0.0
      %209 = vmatprep.subr.mxu0 0.0
      %210 = vmatpush1.msra.mxu0 0.0
      %211 = vmatprep.subr.mxu0 0.0
      %212 = vmatpush1.msra.mxu0 0.0
      %213 = vmatprep.subr.mxu0 0.0
      %214 = vmatpush1.msra.mxu0 0.0
      %215 = vmatprep.subr.mxu0 0.0
      %216 = vmatpush1.msra.mxu0 0.0
      %217 = vmatprep.subr.mxu0 0.0
      %218 = vmatpush1.msra.mxu0 0.0
      %219 = vmatprep.subr.mxu0 0.0
      %220 = vmatpush1.msra.mxu0 0.0
      %221 = vmatprep.subr.mxu0 0.0
      %222 = vmatpush1.msra.mxu0 0.0
      %223 = vmatprep.subr.mxu0 0.0
      %224 = vmatpush1.msra.mxu0 0.0
      %225 = vmatprep.subr.mxu0 0.0
      %226 = vmatpush1.msra.mxu0 0.0
      %227 = vmatprep.subr.mxu0 0.0
      %228 = vmatpush1.msra.mxu0 0.0
      %229 = vmatprep.subr.mxu0 0.0
      %230 = vmatpush1.msra.mxu0 0.0
      %231 = vmatprep.subr.mxu0 0.0
      %232 = vmatpush1.msra.mxu0 0.0
      %233 = vmatprep.subr.mxu0 0.0
      %234 = vmatpush1.msra.mxu0 0.0
      %235 = vmatprep.subr.mxu0 0.0
      %236 = vmatpush1.msra.mxu0 0.0
      %237 = vmatprep.subr.mxu0 0.0
      %238 = vmatpush1.msra.mxu0 0.0
      %239 = vmatprep.subr.mxu0 0.0
      %240 = vmatpush1.msra.mxu0 0.0
      %241 = vmatprep.subr.mxu0 0.0
      %242 = vmatpush1.msra.mxu0 0.0
      %243 = vmatprep.subr.mxu0 0.0
      %244 = vmatpush1.msra.mxu0 0.0
      %245 = vmatprep.subr.mxu0 0.0
      %246 = vmatpush1.msra.mxu0 0.0
      %247 = vmatprep.subr.mxu0 0.0
      %248 = vmatpush1.msra.mxu0 0.0
      %249 = vmatprep.subr.mxu0 0.0
      %250 = vmatpush1.msra.mxu0 0.0
      %251 = vmatprep.subr.mxu0 0.0
      %252 = vmatpush1.msra.mxu0 0.0
      %253 = vmatprep.mubr.f32.mxu0 0.0
      %254 = vmatmul.mubr.f32.gmra.mrb[0].mxu0 %v183
      %v255 = vpop.f32.mrb[0].mxu0
      %v256 = vadd.f32 %v179, %v255
      %v257 = vpop.f32.mrb[0].mxu0
      %258 = vdwg.mxu0
      %vm259 = vcmask 23552
      %260 = vst.msk [vmem:[%s165] sm:$0xff] %vm259, %v256
      %p261 = scmp.lt.s32.totalorder %s14, 1
      %s262 = scalar_select %p261, %s14, 1
      %s263 = smul.addr %s262, 8
      %s264 = scalar_lea.vmem %s3, %s263
      // Predicated region
      $region33: #{model_forward.1} parent=31 // pred_check
        %p265 = pneg %p100
      $region34: #{model_forward.1} parent=31 // pred_check_branch
        %267 = sbr.rel (%p265) target = $region36
      $region35: #{model_forward.1} parent=31 // pred_region
        _
      $region36: #{model_forward.1} parent=31 // pred_fallthru
        _
    $region32: #{model_forward.1} parent=5 // pred_fallthru
      _
    %p268 = scmp.le.s32.totalorder 2, %s9
    // Predicated region
    $region37: #{model_forward.1} parent=5 // pred_check
      %p269 = pneg %p268
    $region38: #{model_forward.1} parent=5 // pred_check_branch
      %271 = sbr.rel (%p269) target = $region40
    $region39: #{model_forward.1} parent=5 // pred_region
      %s272 = ssub.s32 %s9, 2
      // Predicated region
      $region41: #{model_forward.1} parent=39 // pred_check
        %p273 = pneg %p106
      $region42: #{model_forward.1} parent=39 // pred_check_branch
        %275 = sbr.rel (%p273) target = $region44
      $region43: #{model_forward.1} parent=39 // pred_region
        %p276 = scmp.lt.s32.totalorder %s15, 1
        %s277 = scalar_select %p276, %s15, 1
        %s278 = smul.addr %s277, 8
        %s279 = scalar_lea.vmem %s3, %s278
      $region44: #{model_forward.1} parent=39 // pred_fallthru
        _
    $region40: #{model_forward.1} parent=5 // pred_fallthru
      _
  $region6: #{model_forward.1} parent=0 // loop_footer
    %s13 = sadd.s32 1, %s9
  $region7: #{model_forward.1} parent=0 // loop_footer_branch
    %8 = sbr.rel target = $region3
  $region8: #{model_forward.1} parent=0 // loop_exit
    _

</llo_original>
